<compile_context>
chip_gen: v5e
topology: v5e:2x2
jax: 0.10.0
libtpu: 0.0.40
codegen_flags: <defaults>
</compile_context>

<pallas_src>
import jax
import jax.numpy as jnp
from jax.experimental import pallas as pl
from jax.experimental.pallas import tpu as pltpu


def _round_up(x, m):
    return ((x + m - 1) // m) * m


def linear_kernel(x_ref, w_ref, b_ref, o_ref):
    # x_ref: (TB, F) VMEM tile, w_ref: (F, 1) VMEM (resident across grid),
    # b_ref: (1,) SMEM scalar, o_ref: (TB, 1) VMEM tile.
    acc = jnp.dot(
        x_ref[...], w_ref[...],
        preferred_element_type=jnp.float32,
        precision=jax.lax.Precision.HIGHEST,      # full-f32 MXU matvec
    )
    o_ref[...] = (acc + b_ref[0]).astype(o_ref.dtype)  # scalar bias add (VPU slack)


def _vmem_budget_bytes():
    """Usable VMEM budget: half of physical VMEM, capped at 64 MiB."""
    try:
        cap = pltpu.get_tpu_info().vmem_capacity_bytes
    except Exception:
        cap = 64 << 20                       # conservative (v7x-sized) fallback
    return int(min(64 << 20, cap // 2))      # v5e/v6e -> 64 MiB, v7x -> 32 MiB


def _pick_batch_tile(batch, in_features, budget_bytes):
    """Byte-based batch-tile selection with layout-padding-aware accounting."""
    f_pad = _round_up(in_features, 128)          # x rows pad to 128 lanes
    x_row_bytes = f_pad * 4                      # f32
    out_row_bytes = 128 * 4                      # (TB, 1) out tile pads to 128 lanes
    w_bytes = 8 * f_pad * 4                      # weight pads to 8 sublanes
    headroom = 1 << 20

    per_row = 2 * (x_row_bytes + out_row_bytes)  # double-buffered x + out rows
    tb = (budget_bytes - w_bytes - headroom) // per_row
    tb = min(tb, (8 << 20) // x_row_bytes)       # cap x tile at ~8 MiB per buffer
    # Keep >=4 grid steps when the batch allows it (v7x megacore split).
    tb = min(tb, max(8, _round_up(pl.cdiv(batch, 4), 8)))
    tb = max(8, (tb // 8) * 8)                   # sublane-align
    if tb >= batch:
        return batch                             # single full-batch block
    return tb


def linear_forward(x, weight, bias):
    """x: (B, F) f32, weight: (1, F) f32 (PyTorch nn.Linear layout), bias: (1,) f32."""
    B, F = x.shape
    budget = _vmem_budget_bytes()
    TB = _pick_batch_tile(B, F, budget)
    grid = (pl.cdiv(B, TB),)

    # Padding-aware VMEM requirement: double-buffered x + out tiles, resident
    # weight, plus slack; clamped into [4 MiB, generation budget].
    f_pad = _round_up(F, 128)
    tb_pad = _round_up(TB, 8)
    vmem_needed = 2 * tb_pad * (f_pad + 128) * 4 + 8 * f_pad * 4 + (1 << 20)
    vmem_limit = int(min(max(vmem_needed, 4 << 20), budget))

    cost = pl.CostEstimate(
        flops=2 * B * F,
        transcendentals=0,
        bytes_accessed=4 * (B * F + B + F + 1),
    )

    # nn.Linear stores the weight as (1, F); feed the MXU an (F, 1) column so
    # the in-kernel dot reduces over F directly (tiny one-off XLA transpose).
    w_col = weight.reshape(1, F).T

    return pl.pallas_call(
        linear_kernel,
        out_shape=jax.ShapeDtypeStruct((B, 1), x.dtype),
        grid_spec=pltpu.PrefetchScalarGridSpec(
            num_scalar_prefetch=0,
            grid=grid,
            in_specs=[
                # x: streamed batch tiles (double-buffered by Pallas).
                pl.BlockSpec((TB, F), lambda i: (i, 0)),
                # weight column: resident in VMEM across the whole grid.
                pl.BlockSpec((F, 1), lambda i: (0, 0)),
                # bias: scalar in SMEM (no per-step VMEM DMA / vreg broadcast).
                pl.BlockSpec(memory_space=pltpu.MemorySpace.SMEM),
            ],
            out_specs=pl.BlockSpec((TB, 1), lambda i: (i, 0)),
        ),
        compiler_params=pltpu.CompilerParams(
            dimension_semantics=("parallel",),   # batch axis -> both TCs on v7x
            vmem_limit_bytes=vmem_limit,
        ),
        cost_estimate=cost,
    )(x, w_col, bias)


if __name__ == "__main__":
    key = jax.random.PRNGKey(0)
    kx, kw, kb = jax.random.split(key, 3)

    batch = 8
    in_features = 32

    # Deterministic parameter init (matches nn.Linear(in_features, 1) shapes).
    bound = 1.0 / (in_features ** 0.5)
    weight = jax.random.uniform(kw, (1, in_features), jnp.float32, -bound, bound)
    bias = jax.random.uniform(kb, (1,), jnp.float32, -bound, bound)

    x = jax.random.normal(kx, (batch, in_features), jnp.float32)

    out = linear_forward(x, weight, bias)
    out = jax.block_until_ready(out)

    # Sanity check against a full-precision plain-JAX reference.
    ref = jnp.dot(x, weight.T, precision=jax.lax.Precision.HIGHEST) + bias
    assert out.shape == (batch, 1)
    assert jnp.allclose(out, ref, atol=1e-5, rtol=1e-5)

    print("KERNEL_OK")
</pallas_src>

<mosaic_0001>
module attributes {stable_mosaic.version = 11 : i64} {
  func.func @linear_kernel(%arg0: i32, %arg1: memref<8x32xf32, #tpu.memory_space<vmem>>, %arg2: memref<32x1xf32, #tpu.memory_space<vmem>>, %arg3: memref<1xf32, #tpu.memory_space<smem>>, %arg4: memref<8x1xf32, #tpu.memory_space<vmem>>) attributes {dimension_semantics = [#tpu.dimension_semantics<parallel>], iteration_bounds = array<i64: 1>, scalar_prefetch = 0 : i64, scratch_operands = 0 : i64, tpu.core_type = #tpu.core_type<tc>, window_params = [{transform_indices = @transform_0, window_bounds = array<i64: 8, 32>}, {pipeline_mode = #tpu.pipeline_mode<synchronous>, transform_indices = @transform_1, window_bounds = array<i64: 32, 1>}, {transform_indices = @transform_2, window_bounds = array<i64: 1>}, {transform_indices = @transform_3, window_bounds = array<i64: 8, 1>}]} {
    %c0 = arith.constant 0 : index
    %c0_0 = arith.constant 0 : index
    %0 = vector.load %arg1[%c0, %c0_0] : memref<8x32xf32, #tpu.memory_space<vmem>>, vector<8x32xf32>
    %c0_1 = arith.constant 0 : index
    %c0_2 = arith.constant 0 : index
    %1 = vector.load %arg2[%c0_1, %c0_2] : memref<32x1xf32, #tpu.memory_space<vmem>>, vector<32x1xf32>
    %cst = arith.constant dense<0.000000e+00> : vector<8x1xf32>
    %2 = tpu.matmul %0, %1, %cst {dimension_numbers = #tpu.dot_dimension_numbers<[1], [0], [0], [1], [0, 0, 1, 1], [], []>, precision = #tpu.contract_precision<fp32>} : vector<8x32xf32>, vector<32x1xf32>, vector<8x1xf32> -> vector<8x1xf32>
    %c0_3 = arith.constant 0 : index
    %3 = memref.load %arg3[%c0_3] : memref<1xf32, #tpu.memory_space<smem>>
    %4 = vector.broadcast %3 : f32 to vector<8x1xf32>
    %5 = arith.addf %2, %4 : vector<8x1xf32>
    %c0_4 = arith.constant 0 : index
    %c0_5 = arith.constant 0 : index
    %6 = vector.load %arg4[%c0_4, %c0_5] : memref<8x1xf32, #tpu.memory_space<vmem>>, vector<8x1xf32>
    tpu.vector_store %arg4[%c0_4, %c0_5], %5 {strides = array<i32>} : memref<8x1xf32, #tpu.memory_space<vmem>>, vector<8x1xf32>,
    return
  }
  func.func @transform_0(%arg0: i32) -> (i32, i32) {
    %c0_i32 = arith.constant 0 : i32
    %c0_i32_0 = arith.constant 0 : i32
    return %arg0, %c0_i32 : i32, i32
  }
  func.func @transform_1(%arg0: i32) -> (i32, i32) {
    %c0_i32 = arith.constant 0 : i32
    %c0_i32_0 = arith.constant 0 : i32
    %c0_i32_1 = arith.constant 0 : i32
    return %c0_i32, %c0_i32_0 : i32, i32
  }
  func.func @transform_2(%arg0: i32) -> i32 {
    %c0_i32 = arith.constant 0 : i32
    %c0_i32_0 = arith.constant 0 : i32
    return %c0_i32 : i32
  }
  func.func @transform_3(%arg0: i32) -> (i32, i32) {
    %c0_i32 = arith.constant 0 : i32
    %c0_i32_0 = arith.constant 0 : i32
    return %arg0, %c0_i32 : i32, i32
  }
}

</mosaic_0001>

<llo_original>
// kernel: tpu_custom_call.1
$region0: #{tpu_custom_call.1}
  #allocation0 [shape = 'u32[]', space=smem, size = 0x4, offset = 0x4, fixed_abs, tag = 'smem constant byte address 0x4 - core index']
  #allocation1 [shape = 'u32[72,128]{1,0:T(1,128)}', space=vmem, size = 0x9000, scoped, tag = 'internal scratch']
  #allocation2 [shape = 'f32[1]{0:T(128)S(6)}', space=smem, size = 0x200, scoped, tag = 'scoped memory for tpu_custom_call.1']
  %s0 = inlined_call_operand.vmem [shape: f32[8,32], index: 0, kind: input, shape index: {}]
  %s1 = inlined_call_operand.vmem [shape: f32[32,1], index: 1, kind: input, shape index: {}]
  %s2 = inlined_call_operand.<no memory space> [shape: f32[1], index: 2, kind: input, shape index: {}]
  %s3 = inlined_call_operand.vmem [shape: f32[8,1], index: 3, kind: output, shape index: {}]
  %s4 = sld [smem:[#allocation0]]
  $region22: #{tpu_custom_call.1} parent=0
    _
  %s6 = ssub.s32 1, %s4
  %s7 = scalar_select 0, %s6, %s4
  %8 = sst [smem:[#allocation2]] %s2
  // Predicated region
  $region2: #{tpu_custom_call.1} parent=0 // pred_check
    _
  $region3: #{tpu_custom_call.1} parent=0 // pred_check_branch
    %10 = sbr.rel (0) target = $region5
  $region4: #{tpu_custom_call.1} parent=0 // pred_region
    _
  $region5: #{tpu_custom_call.1} parent=0 // pred_fallthru
    _
  // Predicated region
  $region6: #{tpu_custom_call.1} parent=0 // pred_check
    _
  $region7: #{tpu_custom_call.1} parent=0 // pred_check_branch
    %12 = sbr.rel (0) target = $region9
  $region8: #{tpu_custom_call.1} parent=0 // pred_region
    _
  $region9: #{tpu_custom_call.1} parent=0 // pred_fallthru
    _
  // Predicated region
  $region10: #{tpu_custom_call.1} parent=0 // pred_check
    _
  $region11: #{tpu_custom_call.1} parent=0 // pred_check_branch
    %14 = sbr.rel (0) target = $region13
  $region12: #{tpu_custom_call.1} parent=0 // pred_region
    _
  $region13: #{tpu_custom_call.1} parent=0 // pred_fallthru
    _
  %v15 = vld [vmem:[%s0] sm:$0xff]
  %v16 = vld [vmem:[%s1] sm:$0xff]
  %v17 = vld [vmem:[%s1 + $0x8] sm:$0xff]
  %v18 = vld [vmem:[%s1 + $0x10] sm:$0xff]
  %v19 = vld [vmem:[%s1 + $0x18] sm:$0xff]
  %s20 = sld [smem:[#allocation2]]
  %v21 = vstv %s20
  %vm22 = vcmask 261120
  %v24 = vsel %vm22, %v15, 0
  %26 = vmatpush.msra.mxu0 0.0
  %27 = vmatpush.msra.mxu0 0.0
  %28 = vmatpush.msra.mxu0 0.0
  %29 = vmatpush.msra.mxu0 0.0
  %30 = vmatpush.msra.mxu0 0.0
  %31 = vmatpush.msra.mxu0 0.0
  %32 = vmatpush.msra.mxu0 0.0
  %33 = vmatpush.msra.mxu0 0.0
  %34 = vmatpush.msra.mxu0 0.0
  %35 = vmatpush.msra.mxu0 0.0
  %36 = vmatpush.msra.mxu0 0.0
  %37 = vmatpush.msra.mxu0 0.0
  %v38 = vand.u32 %v19, 4294901760
  %39 = vmatpush.msra.mxu0 %v38
  %v40 = vand.u32 %v18, 4294901760
  %41 = vmatpush.msra.mxu0 %v40
  %v42 = vand.u32 %v17, 4294901760
  %43 = vmatpush.msra.mxu0 %v42
  %v44 = vand.u32 %v16, 4294901760
  %45 = vmatpush.msra.mxu0 %v44
  %v46 = vand.u32 %v24, 4294901760
  %v47 = vsub.f32 %v24, %v46
  %v48 = vand.u32 %v47, 4294901760
  %v49 = vsub.f32 %v47, %v48
  %v50 = vand.u32 %v49, 4294901760
  %51 = vmatmul.f32.gmra.mxu0 %v50
  %v52 = vpop.f32.mrf.mxu0
  %v53 = vadd.f32 %v21, %v52
  %54 = vdwg.mxu0
  %55 = vmatpush.msra.mxu0 0.0
  %56 = vmatpush.msra.mxu0 0.0
  %57 = vmatpush.msra.mxu0 0.0
  %58 = vmatpush.msra.mxu0 0.0
  %59 = vmatpush.msra.mxu0 0.0
  %60 = vmatpush.msra.mxu0 0.0
  %61 = vmatpush.msra.mxu0 0.0
  %62 = vmatpush.msra.mxu0 0.0
  %63 = vmatpush.msra.mxu0 0.0
  %64 = vmatpush.msra.mxu0 0.0
  %65 = vmatpush.msra.mxu0 0.0
  %66 = vmatpush.msra.mxu0 0.0
  %v67 = vand.u32 %v19, 4294901760
  %v68 = vsub.f32 %v19, %v67
  %v69 = vand.u32 %v68, 4294901760
  %v70 = vsub.f32 %v68, %v69
  %v71 = vand.u32 %v70, 4294901760
  %72 = vmatpush.msra.mxu0 %v71
  %v73 = vand.u32 %v18, 4294901760
  %v74 = vsub.f32 %v18, %v73
  %v75 = vand.u32 %v74, 4294901760
  %v76 = vsub.f32 %v74, %v75
  %v77 = vand.u32 %v76, 4294901760
  %78 = vmatpush.msra.mxu0 %v77
  %v79 = vand.u32 %v17, 4294901760
  %v80 = vsub.f32 %v17, %v79
  %v81 = vand.u32 %v80, 4294901760
  %v82 = vsub.f32 %v80, %v81
  %v83 = vand.u32 %v82, 4294901760
  %84 = vmatpush.msra.mxu0 %v83
  %v85 = vand.u32 %v16, 4294901760
  %v86 = vsub.f32 %v16, %v85
  %v87 = vand.u32 %v86, 4294901760
  %v88 = vsub.f32 %v86, %v87
  %v89 = vand.u32 %v88, 4294901760
  %90 = vmatpush.msra.mxu0 %v89
  %v91 = vand.u32 %v24, 4294901760
  %92 = vmatmul.f32.gmra.mxu0 %v91
  %v93 = vpop.f32.mrf.mxu0
  %v94 = vadd.f32 %v53, %v93
  %95 = vdwg.mxu0
  %96 = vmatpush.msra.mxu0 0.0
  %97 = vmatpush.msra.mxu0 0.0
  %98 = vmatpush.msra.mxu0 0.0
  %99 = vmatpush.msra.mxu0 0.0
  %100 = vmatpush.msra.mxu0 0.0
  %101 = vmatpush.msra.mxu0 0.0
  %102 = vmatpush.msra.mxu0 0.0
  %103 = vmatpush.msra.mxu0 0.0
  %104 = vmatpush.msra.mxu0 0.0
  %105 = vmatpush.msra.mxu0 0.0
  %106 = vmatpush.msra.mxu0 0.0
  %107 = vmatpush.msra.mxu0 0.0
  %v108 = vand.u32 %v19, 4294901760
  %v109 = vsub.f32 %v19, %v108
  %110 = vmatpush.msra.mxu0 %v109
  %v111 = vand.u32 %v18, 4294901760
  %v112 = vsub.f32 %v18, %v111
  %113 = vmatpush.msra.mxu0 %v112
  %v114 = vand.u32 %v17, 4294901760
  %v115 = vsub.f32 %v17, %v114
  %116 = vmatpush.msra.mxu0 %v115
  %v117 = vand.u32 %v16, 4294901760
  %v118 = vsub.f32 %v16, %v117
  %119 = vmatpush.msra.mxu0 %v118
  %v120 = vand.u32 %v24, 4294901760
  %v121 = vsub.f32 %v24, %v120
  %122 = vmatmul.f32.gmra.mxu0 %v121
  %v123 = vpop.f32.mrf.mxu0
  %v124 = vadd.f32 %v94, %v123
  %125 = vdwg.mxu0
  %126 = vmatpush.msra.mxu0 0.0
  %127 = vmatpush.msra.mxu0 0.0
  %128 = vmatpush.msra.mxu0 0.0
  %129 = vmatpush.msra.mxu0 0.0
  %130 = vmatpush.msra.mxu0 0.0
  %131 = vmatpush.msra.mxu0 0.0
  %132 = vmatpush.msra.mxu0 0.0
  %133 = vmatpush.msra.mxu0 0.0
  %134 = vmatpush.msra.mxu0 0.0
  %135 = vmatpush.msra.mxu0 0.0
  %136 = vmatpush.msra.mxu0 0.0
  %137 = vmatpush.msra.mxu0 0.0
  %v138 = vand.u32 %v19, 4294901760
  %139 = vmatpush.msra.mxu0 %v138
  %v140 = vand.u32 %v18, 4294901760
  %141 = vmatpush.msra.mxu0 %v140
  %v142 = vand.u32 %v17, 4294901760
  %143 = vmatpush.msra.mxu0 %v142
  %v144 = vand.u32 %v16, 4294901760
  %145 = vmatpush.msra.mxu0 %v144
  %v146 = vand.u32 %v24, 4294901760
  %v147 = vsub.f32 %v24, %v146
  %v148 = vand.u32 %v147, 4294901760
  %149 = vmatmul.f32.gmra.mxu0 %v148
  %v150 = vpop.f32.mrf.mxu0
  %v151 = vadd.f32 %v124, %v150
  %152 = vdwg.mxu0
  %153 = vmatpush.msra.mxu0 0.0
  %154 = vmatpush.msra.mxu0 0.0
  %155 = vmatpush.msra.mxu0 0.0
  %156 = vmatpush.msra.mxu0 0.0
  %157 = vmatpush.msra.mxu0 0.0
  %158 = vmatpush.msra.mxu0 0.0
  %159 = vmatpush.msra.mxu0 0.0
  %160 = vmatpush.msra.mxu0 0.0
  %161 = vmatpush.msra.mxu0 0.0
  %162 = vmatpush.msra.mxu0 0.0
  %163 = vmatpush.msra.mxu0 0.0
  %164 = vmatpush.msra.mxu0 0.0
  %v165 = vand.u32 %v19, 4294901760
  %v166 = vsub.f32 %v19, %v165
  %v167 = vand.u32 %v166, 4294901760
  %168 = vmatpush.msra.mxu0 %v167
  %v169 = vand.u32 %v18, 4294901760
  %v170 = vsub.f32 %v18, %v169
  %v171 = vand.u32 %v170, 4294901760
  %172 = vmatpush.msra.mxu0 %v171
  %v173 = vand.u32 %v17, 4294901760
  %v174 = vsub.f32 %v17, %v173
  %v175 = vand.u32 %v174, 4294901760
  %176 = vmatpush.msra.mxu0 %v175
  %v177 = vand.u32 %v16, 4294901760
  %v178 = vsub.f32 %v16, %v177
  %v179 = vand.u32 %v178, 4294901760
  %180 = vmatpush.msra.mxu0 %v179
  %v181 = vand.u32 %v24, 4294901760
  %182 = vmatmul.f32.gmra.mxu0 %v181
  %v183 = vpop.f32.mrf.mxu0
  %v184 = vadd.f32 %v151, %v183
  %185 = vdwg.mxu0
  %186 = vmatpush.msra.mxu0 0.0
  %187 = vmatpush.msra.mxu0 0.0
  %188 = vmatpush.msra.mxu0 0.0
  %189 = vmatpush.msra.mxu0 0.0
  %190 = vmatpush.msra.mxu0 0.0
  %191 = vmatpush.msra.mxu0 0.0
  %192 = vmatpush.msra.mxu0 0.0
  %193 = vmatpush.msra.mxu0 0.0
  %194 = vmatpush.msra.mxu0 0.0
  %195 = vmatpush.msra.mxu0 0.0
  %196 = vmatpush.msra.mxu0 0.0
  %197 = vmatpush.msra.mxu0 0.0
  %v198 = vand.u32 %v19, 4294901760
  %199 = vmatpush.msra.mxu0 %v198
  %v200 = vand.u32 %v18, 4294901760
  %201 = vmatpush.msra.mxu0 %v200
  %v202 = vand.u32 %v17, 4294901760
  %203 = vmatpush.msra.mxu0 %v202
  %v204 = vand.u32 %v16, 4294901760
  %205 = vmatpush.msra.mxu0 %v204
  %v206 = vand.u32 %v24, 4294901760
  %207 = vmatmul.f32.gmra.mxu0 %v206
  %v208 = vpop.f32.mrf.mxu0
  %v209 = vadd.f32 %v184, %v208
  %210 = vdwg.mxu0
  %vm211 = vcmask 7168
  %212 = vst.msk [vmem:[%s3] sm:$0xff] %vm211, %v209
  // Predicated region
  $region14: #{tpu_custom_call.1} parent=0 // pred_check
    _
  $region15: #{tpu_custom_call.1} parent=0 // pred_check_branch
    %214 = sbr.rel (0) target = $region17
  $region16: #{tpu_custom_call.1} parent=0 // pred_region
    _
  $region17: #{tpu_custom_call.1} parent=0 // pred_fallthru
    _
  // Predicated region
  $region18: #{tpu_custom_call.1} parent=0 // pred_check
    _
  $region19: #{tpu_custom_call.1} parent=0 // pred_check_branch
    %216 = sbr.rel (0) target = $region21
  $region20: #{tpu_custom_call.1} parent=0 // pred_region
    _
  $region21: #{tpu_custom_call.1} parent=0 // pred_fallthru
    _

</llo_original>
